<compile_context>
chip_gen: v7x
topology: tpu7x:2x2x1
jax: 0.10.0
libtpu: 0.0.40
codegen_flags: <defaults>
</compile_context>

<pallas_src>
import jax
import jax.numpy as jnp
from jax.experimental import pallas as pl
from jax.experimental.pallas import tpu as pltpu

_LANE = 128
_VMEM_BUDGET = 48 * 1024 * 1024  # conservative vs v7x's 64 MiB physical VMEM


def _round_up(n, m):
    return ((n + m - 1) // m) * m


def _sublane(dtype):
    # Packed-vreg sublane granularity: 8 rows f32, 16 bf16, 32 int8/fp8.
    return max(8, 32 // jnp.dtype(dtype).itemsize)


def path_gcn_kernel(x_ref, w1_ref, b1_ref, w2_ref, b2_ref, out_ref):
    # fc1 on the MXU (f32 accumulate); bias-add + ReLU on the VPU in f32.
    h = jnp.dot(x_ref[...], w1_ref[...], preferred_element_type=jnp.float32)
    h = jnp.maximum(h + b1_ref[...], 0.0)
    # fc2: cast activations to the MXU operand dtype once (no-op for f32).
    y = jnp.dot(h.astype(w2_ref.dtype), w2_ref[...],
                preferred_element_type=jnp.float32)
    out_ref[...] = (y + b2_ref[...]).astype(out_ref.dtype)


def init_params(key, input_dim, hidden_dim, output_dim):
    """Deterministic init mimicking nn.Linear's uniform(-1/sqrt(fan_in), ...)."""
    k1, k2, k3, k4 = jax.random.split(key, 4)
    bound1 = 1.0 / jnp.sqrt(input_dim)
    bound2 = 1.0 / jnp.sqrt(hidden_dim)
    # Stored already transposed: (in, out) instead of torch's (out, in).
    w1 = jax.random.uniform(k1, (input_dim, hidden_dim), jnp.float32, -bound1, bound1)
    b1 = jax.random.uniform(k2, (hidden_dim,), jnp.float32, -bound1, bound1)
    w2 = jax.random.uniform(k3, (hidden_dim, output_dim), jnp.float32, -bound2, bound2)
    b2 = jax.random.uniform(k4, (output_dim,), jnp.float32, -bound2, bound2)
    return w1, b1, w2, b2


def prepare_params(w1, b1, w2, b2, *, compute_dtype=jnp.float32):
    """One-time (per model) packing of the weights for the kernel.

    * Weights are stored transposed vs torch: w1 (in, hidden), w2 (hidden, out).
    * Only the hidden dim is zero-padded to a multiple of 128 lanes. This is
      exact: padded w1 cols / b1 entries are 0, ReLU(0)=0, padded w2 rows add
      0.  in_dim / out_dim stay unpadded so x never needs a padding copy and
      the output writeback is not amplified for tiny out_dim.
    * Weights are cast to `compute_dtype` (MXU operand dtype) here, once.
      Passing bf16 is an intentional accuracy/speed tradeoff; accumulation,
      bias-add and ReLU stay in f32 inside the kernel either way.
    """
    in_dim, hidden = w1.shape
    out_dim = w2.shape[1]
    hid_p = _round_up(hidden, _LANE)
    w1 = w1.astype(compute_dtype)
    w2 = w2.astype(compute_dtype)
    b1 = b1.astype(jnp.float32)
    b2 = b2.astype(jnp.float32)
    if hid_p != hidden:
        w1 = jnp.zeros((in_dim, hid_p), compute_dtype).at[:, :hidden].set(w1)
        b1 = jnp.zeros((hid_p,), jnp.float32).at[:hidden].set(b1)
        w2 = jnp.zeros((hid_p, out_dim), compute_dtype).at[:hidden, :].set(w2)
    return (w1, b1.reshape(1, hid_p), w2, b2.reshape(1, out_dim))


def _vmem_estimate(tile_b, in_dim, hid_p, out_dim, cbytes, obytes):
    x_tile = tile_b * in_dim * cbytes
    o_tile = tile_b * out_dim * obytes
    h_tile = tile_b * hid_p * 4                      # f32 intermediate
    weights = ((in_dim * hid_p + hid_p * out_dim) * cbytes
               + (hid_p + out_dim) * 4)
    # x/out are double-buffered by the pipeline; weights counted at 2 buffers
    # (conservative: covers the fallback when Buffered(1) is unavailable).
    return 2 * (x_tile + o_tile) + h_tile + 2 * weights


def _pallas_forward(x, w1, b1, w2, b2, *, out_dtype, tile_b, n_tiles,
                    vmem_limit, single_buffer_weights):
    B, in_dim = x.shape
    hid_p = w1.shape[1]
    out_dim = w2.shape[1]
    wkw = dict(pipeline_mode=pl.Buffered(1)) if single_buffer_weights else {}
    return pl.pallas_call(
        path_gcn_kernel,
        out_shape=jax.ShapeDtypeStruct((B, out_dim), out_dtype),
        grid=(n_tiles,),
        in_specs=[
            # x: one batch tile per grid step (pipelined HBM<->VMEM; the last
            # block is clipped by Pallas when B % tile_b != 0).
            pl.BlockSpec((tile_b, in_dim), lambda i: (i, 0)),
            # Weights / biases: constant block index -> DMA'd once and kept
            # resident in VMEM across all batch tiles (single-buffered where
            # the installed Pallas supports pipeline_mode).
            pl.BlockSpec((in_dim, hid_p), lambda i: (0, 0), **wkw),
            pl.BlockSpec((1, hid_p), lambda i: (0, 0), **wkw),
            pl.BlockSpec((hid_p, out_dim), lambda i: (0, 0), **wkw),
            pl.BlockSpec((1, out_dim), lambda i: (0, 0), **wkw),
        ],
        out_specs=pl.BlockSpec((tile_b, out_dim), lambda i: (i, 0)),
        compiler_params=pltpu.CompilerParams(
            # Batch tiles are independent -> shard across v7x's 2 TensorCores.
            dimension_semantics=("parallel",),
            vmem_limit_bytes=vmem_limit),
    )(x, w1, b1, w2, b2)


_BUFFERED_SUPPORTED = True  # flipped off if pipeline_mode=pl.Buffered rejects


def path_gcn_forward(x, params, *, tile_b=512):
    """y = relu(x @ w1 + b1) @ w2 + b2, params from prepare_params().

    x: (B, in_dim). Returns (B, out_dim) in x.dtype. If the params were
    prepared in a different compute dtype (bf16 fast path) x is cast to that
    dtype for the MXU operands.
    """
    global _BUFFERED_SUPPORTED
    w1, b1, w2, b2 = params
    B, in_dim = x.shape
    assert w1.shape[0] == in_dim
    hid_p = w1.shape[1]
    out_dim = w2.shape[1]
    out_dtype = x.dtype
    cdt = w1.dtype
    if x.dtype != cdt:
        x = x.astype(cdt)  # opt-in bf16-operand fast path

    # Batch tile: dtype-aware sublane granularity, as large as the VMEM budget
    # allows, split so the grid has >= 2 steps whenever the batch permits
    # (with dimension_semantics=("parallel",) a 1-step grid idles one v7x TC).
    sub = _sublane(cdt)
    cbytes = jnp.dtype(cdt).itemsize
    obytes = jnp.dtype(out_dtype).itemsize
    tile_b = max(sub, _round_up(min(int(tile_b), _round_up(B, sub)), sub))
    while (tile_b > sub and
           _vmem_estimate(tile_b, in_dim, hid_p, out_dim, cbytes, obytes)
           > _VMEM_BUDGET):
        tile_b = max(sub, _round_up(tile_b // 2, sub))
    n_tiles = pl.cdiv(B, tile_b)
    if n_tiles < 2 and B > sub:
        tile_b = _round_up(pl.cdiv(B, 2), sub)
        n_tiles = pl.cdiv(B, tile_b)

    est = _vmem_estimate(tile_b, in_dim, hid_p, out_dim, cbytes, obytes)
    vmem_limit = int(min(max(est + est // 2 + (4 << 20), 32 << 20),
                         _VMEM_BUDGET))

    kwargs = dict(out_dtype=out_dtype, tile_b=tile_b, n_tiles=n_tiles,
                  vmem_limit=vmem_limit)
    if _BUFFERED_SUPPORTED:
        try:
            return _pallas_forward(x, w1, b1, w2, b2,
                                   single_buffer_weights=True, **kwargs)
        except Exception:
            # This Pallas build rejected pipeline_mode=pl.Buffered(1); fall
            # back to default (double-buffered) weight specs.
            _BUFFERED_SUPPORTED = False
    return _pallas_forward(x, w1, b1, w2, b2,
                           single_buffer_weights=False, **kwargs)


if __name__ == "__main__":
    key = jax.random.PRNGKey(0)
    kx, kp, kx2, kp2 = jax.random.split(key, 4)

    # --- 1) Small f32 case (shapes implied by the module): exact check. ---
    batch, input_dim, hidden_dim, output_dim = 8, 16, 32, 4
    x = jax.random.normal(kx, (batch, input_dim), jnp.float32)
    w1, b1, w2, b2 = init_params(kp, input_dim, hidden_dim, output_dim)
    params = prepare_params(w1, b1, w2, b2, compute_dtype=jnp.float32)

    out = path_gcn_forward(x, params)
    jax.block_until_ready(out)

    ref = jnp.maximum(x @ w1 + b1, 0.0) @ w2 + b2
    assert out.shape == (batch, output_dim)
    assert jnp.allclose(out, ref, atol=1e-5, rtol=1e-5)

    # --- 2) Larger ragged-batch bf16 run: multi-tile parallel grid
    #        (1000 % 512 != 0 -> clipped last block), padded hidden
    #        (200 -> 256), tiny unpadded out_dim (10). ---
    B2, in2, hid2, out2 = 1000, 96, 200, 10
    x2 = jax.random.normal(kx2, (B2, in2), jnp.float32)
    w1b, b1b, w2b, b2b = init_params(kp2, in2, hid2, out2)
    params_bf = prepare_params(w1b, b1b, w2b, b2b, compute_dtype=jnp.bfloat16)

    out_bf = path_gcn_forward(x2.astype(jnp.bfloat16), params_bf, tile_b=512)
    jax.block_until_ready(out_bf)

    # Reference with the same bf16-operand / f32-accumulate semantics.
    h_ref = jnp.maximum(
        jnp.dot(x2.astype(jnp.bfloat16), w1b.astype(jnp.bfloat16),
                preferred_element_type=jnp.float32) + b1b, 0.0)
    y_ref = jnp.dot(h_ref.astype(jnp.bfloat16), w2b.astype(jnp.bfloat16),
                    preferred_element_type=jnp.float32) + b2b
    assert out_bf.shape == (B2, out2)
    assert jnp.allclose(out_bf.astype(jnp.float32), y_ref, atol=3e-2, rtol=3e-2)

    print("KERNEL_OK")
</pallas_src>

<mosaic_0001>
module attributes {stable_mosaic.version = 11 : i64} {
  func.func @path_gcn_kernel(%arg0: i32, %arg1: memref<8x16xf32, #tpu.memory_space<vmem>>, %arg2: memref<16x128xf32, #tpu.memory_space<vmem>>, %arg3: memref<1x128xf32, #tpu.memory_space<vmem>>, %arg4: memref<128x4xf32, #tpu.memory_space<vmem>>, %arg5: memref<1x4xf32, #tpu.memory_space<vmem>>, %arg6: memref<8x4xf32, #tpu.memory_space<vmem>>) attributes {dimension_semantics = [#tpu.dimension_semantics<parallel>], iteration_bounds = array<i64: 1>, scalar_prefetch = 0 : i64, scratch_operands = 0 : i64, tpu.core_type = #tpu.core_type<tc>, window_params = [{transform_indices = @transform_0, window_bounds = array<i64: 8, 16>}, {pipeline_mode = #tpu.pipeline_mode<synchronous>, transform_indices = @transform_1, window_bounds = array<i64: 16, 128>}, {pipeline_mode = #tpu.pipeline_mode<synchronous>, transform_indices = @transform_2, window_bounds = array<i64: 1, 128>}, {pipeline_mode = #tpu.pipeline_mode<synchronous>, transform_indices = @transform_3, window_bounds = array<i64: 128, 4>}, {pipeline_mode = #tpu.pipeline_mode<synchronous>, transform_indices = @transform_4, window_bounds = array<i64: 1, 4>}, {transform_indices = @transform_5, window_bounds = array<i64: 8, 4>}]} {
    %c0 = arith.constant 0 : index
    %c0_0 = arith.constant 0 : index
    %0 = vector.load %arg1[%c0, %c0_0] : memref<8x16xf32, #tpu.memory_space<vmem>>, vector<8x16xf32>
    %c0_1 = arith.constant 0 : index
    %c0_2 = arith.constant 0 : index
    %1 = vector.load %arg2[%c0_1, %c0_2] : memref<16x128xf32, #tpu.memory_space<vmem>>, vector<16x128xf32>
    %cst = arith.constant dense<0.000000e+00> : vector<8x128xf32>
    %2 = tpu.matmul %0, %1, %cst {dimension_numbers = #tpu.dot_dimension_numbers<[1], [0], [0], [1], [0, 0, 1, 1], [], []>} : vector<8x16xf32>, vector<16x128xf32>, vector<8x128xf32> -> vector<8x128xf32>
    %c0_3 = arith.constant 0 : index
    %c0_4 = arith.constant 0 : index
    %3 = vector.load %arg3[%c0_3, %c0_4] : memref<1x128xf32, #tpu.memory_space<vmem>>, vector<1x128xf32>
    %4 = vector.broadcast %3 : vector<1x128xf32> to vector<8x128xf32>
    %5 = arith.addf %2, %4 : vector<8x128xf32>
    %cst_5 = arith.constant 0.000000e+00 : f32
    %6 = vector.broadcast %cst_5 : f32 to vector<8x128xf32>
    %7 = arith.maximumf %5, %6 : vector<8x128xf32>
    %c0_6 = arith.constant 0 : index
    %c0_7 = arith.constant 0 : index
    %8 = vector.load %arg4[%c0_6, %c0_7] : memref<128x4xf32, #tpu.memory_space<vmem>>, vector<128x4xf32>
    %cst_8 = arith.constant dense<0.000000e+00> : vector<8x4xf32>
    %9 = tpu.matmul %7, %8, %cst_8 {dimension_numbers = #tpu.dot_dimension_numbers<[1], [0], [0], [1], [0, 0, 1, 1], [], []>} : vector<8x128xf32>, vector<128x4xf32>, vector<8x4xf32> -> vector<8x4xf32>
    %c0_9 = arith.constant 0 : index
    %c0_10 = arith.constant 0 : index
    %10 = vector.load %arg5[%c0_9, %c0_10] : memref<1x4xf32, #tpu.memory_space<vmem>>, vector<1x4xf32>
    %11 = vector.broadcast %10 : vector<1x4xf32> to vector<8x4xf32>
    %12 = arith.addf %9, %11 : vector<8x4xf32>
    %c0_11 = arith.constant 0 : index
    %c0_12 = arith.constant 0 : index
    %13 = vector.load %arg6[%c0_11, %c0_12] : memref<8x4xf32, #tpu.memory_space<vmem>>, vector<8x4xf32>
    tpu.vector_store %arg6[%c0_11, %c0_12], %12 {strides = array<i32>} : memref<8x4xf32, #tpu.memory_space<vmem>>, vector<8x4xf32>,
    return
  }
  func.func @transform_0(%arg0: i32) -> (i32, i32) {
    %c0_i32 = arith.constant 0 : i32
    %c0_i32_0 = arith.constant 0 : i32
    return %arg0, %c0_i32 : i32, i32
  }
  func.func @transform_1(%arg0: i32) -> (i32, i32) {
    %c0_i32 = arith.constant 0 : i32
    %c0_i32_0 = arith.constant 0 : i32
    %c0_i32_1 = arith.constant 0 : i32
    return %c0_i32, %c0_i32_0 : i32, i32
  }
  func.func @transform_2(%arg0: i32) -> (i32, i32) {
    %c0_i32 = arith.constant 0 : i32
    %c0_i32_0 = arith.constant 0 : i32
    %c0_i32_1 = arith.constant 0 : i32
    return %c0_i32, %c0_i32_0 : i32, i32
  }
  func.func @transform_3(%arg0: i32) -> (i32, i32) {
    %c0_i32 = arith.constant 0 : i32
    %c0_i32_0 = arith.constant 0 : i32
    %c0_i32_1 = arith.constant 0 : i32
    return %c0_i32, %c0_i32_0 : i32, i32
  }
  func.func @transform_4(%arg0: i32) -> (i32, i32) {
    %c0_i32 = arith.constant 0 : i32
    %c0_i32_0 = arith.constant 0 : i32
    %c0_i32_1 = arith.constant 0 : i32
    return %c0_i32, %c0_i32_0 : i32, i32
  }
  func.func @transform_5(%arg0: i32) -> (i32, i32) {
    %c0_i32 = arith.constant 0 : i32
    %c0_i32_0 = arith.constant 0 : i32
    return %arg0, %c0_i32 : i32, i32
  }
}

module attributes {stable_mosaic.version = 11 : i64} {
  func.func @path_gcn_kernel(%arg0: i32, %arg1: memref<8x16xf32, #tpu.memory_space<vmem>>, %arg2: memref<16x128xf32, #tpu.memory_space<vmem>>, %arg3: memref<1x128xf32, #tpu.memory_space<vmem>>, %arg4: memref<128x4xf32, #tpu.memory_space<vmem>>, %arg5: memref<1x4xf32, #tpu.memory_space<vmem>>, %arg6: memref<8x4xf32, #tpu.memory_space<vmem>>) attributes {dimension_semantics = [#tpu.dimension_semantics<parallel>], iteration_bounds = array<i64: 1>, scalar_prefetch = 0 : i64, scratch_operands = 0 : i64, tpu.core_type = #tpu.core_type<tc>, window_params = [{transform_indices = @transform_0, window_bounds = array<i64: 8, 16>}, {pipeline_mode = #tpu.pipeline_mode<synchronous>, transform_indices = @transform_1, window_bounds = array<i64: 16, 128>}, {pipeline_mode = #tpu.pipeline_mode<synchronous>, transform_indices = @transform_2, window_bounds = array<i64: 1, 128>}, {pipeline_mode = #tpu.pipeline_mode<synchronous>, transform_indices = @transform_3, window_bounds = array<i64: 128, 4>}, {pipeline_mode = #tpu.pipeline_mode<synchronous>, transform_indices = @transform_4, window_bounds = array<i64: 1, 4>}, {transform_indices = @transform_5, window_bounds = array<i64: 8, 4>}]} {
    %c0 = arith.constant 0 : index
    %c0_0 = arith.constant 0 : index
    %0 = vector.load %arg1[%c0, %c0_0] : memref<8x16xf32, #tpu.memory_space<vmem>>, vector<8x16xf32>
    %c0_1 = arith.constant 0 : index
    %c0_2 = arith.constant 0 : index
    %1 = vector.load %arg2[%c0_1, %c0_2] : memref<16x128xf32, #tpu.memory_space<vmem>>, vector<16x128xf32>
    %cst = arith.constant dense<0.000000e+00> : vector<8x128xf32>
    %2 = tpu.matmul %0, %1, %cst {dimension_numbers = #tpu.dot_dimension_numbers<[1], [0], [0], [1], [0, 0, 1, 1], [], []>} : vector<8x16xf32>, vector<16x128xf32>, vector<8x128xf32> -> vector<8x128xf32>
    %c0_3 = arith.constant 0 : index
    %c0_4 = arith.constant 0 : index
    %3 = vector.load %arg3[%c0_3, %c0_4] : memref<1x128xf32, #tpu.memory_space<vmem>>, vector<1x128xf32>
    %4 = vector.broadcast %3 : vector<1x128xf32> to vector<8x128xf32>
    %5 = arith.addf %2, %4 : vector<8x128xf32>
    %cst_5 = arith.constant 0.000000e+00 : f32
    %6 = vector.broadcast %cst_5 : f32 to vector<8x128xf32>
    %7 = arith.maximumf %5, %6 : vector<8x128xf32>
    %c0_6 = arith.constant 0 : index
    %c0_7 = arith.constant 0 : index
    %8 = vector.load %arg4[%c0_6, %c0_7] : memref<128x4xf32, #tpu.memory_space<vmem>>, vector<128x4xf32>
    %cst_8 = arith.constant dense<0.000000e+00> : vector<8x4xf32>
    %9 = tpu.matmul %7, %8, %cst_8 {dimension_numbers = #tpu.dot_dimension_numbers<[1], [0], [0], [1], [0, 0, 1, 1], [], []>} : vector<8x128xf32>, vector<128x4xf32>, vector<8x4xf32> -> vector<8x4xf32>
    %c0_9 = arith.constant 0 : index
    %c0_10 = arith.constant 0 : index
    %10 = vector.load %arg5[%c0_9, %c0_10] : memref<1x4xf32, #tpu.memory_space<vmem>>, vector<1x4xf32>
    %11 = vector.broadcast %10 : vector<1x4xf32> to vector<8x4xf32>
    %12 = arith.addf %9, %11 : vector<8x4xf32>
    %c0_11 = arith.constant 0 : index
    %c0_12 = arith.constant 0 : index
    %13 = vector.load %arg6[%c0_11, %c0_12] : memref<8x4xf32, #tpu.memory_space<vmem>>, vector<8x4xf32>
    tpu.vector_store %arg6[%c0_11, %c0_12], %12 {strides = array<i32>} : memref<8x4xf32, #tpu.memory_space<vmem>>, vector<8x4xf32>,
    return
  }
  func.func @transform_0(%arg0: i32) -> (i32, i32) {
    %c0_i32 = arith.constant 0 : i32
    %c0_i32_0 = arith.constant 0 : i32
    return %arg0, %c0_i32 : i32, i32
  }
  func.func @transform_1(%arg0: i32) -> (i32, i32) {
    %c0_i32 = arith.constant 0 : i32
    %c0_i32_0 = arith.constant 0 : i32
    %c0_i32_1 = arith.constant 0 : i32
    return %c0_i32, %c0_i32_0 : i32, i32
  }
  func.func @transform_2(%arg0: i32) -> (i32, i32) {
    %c0_i32 = arith.constant 0 : i32
    %c0_i32_0 = arith.constant 0 : i32
    %c0_i32_1 = arith.constant 0 : i32
    return %c0_i32, %c0_i32_0 : i32, i32
  }
  func.func @transform_3(%arg0: i32) -> (i32, i32) {
    %c0_i32 = arith.constant 0 : i32
    %c0_i32_0 = arith.constant 0 : i32
    %c0_i32_1 = arith.constant 0 : i32
    return %c0_i32, %c0_i32_0 : i32, i32
  }
  func.func @transform_4(%arg0: i32) -> (i32, i32) {
    %c0_i32 = arith.constant 0 : i32
    %c0_i32_0 = arith.constant 0 : i32
    %c0_i32_1 = arith.constant 0 : i32
    return %c0_i32, %c0_i32_0 : i32, i32
  }
  func.func @transform_5(%arg0: i32) -> (i32, i32) {
    %c0_i32 = arith.constant 0 : i32
    %c0_i32_0 = arith.constant 0 : i32
    return %arg0, %c0_i32 : i32, i32
  }
}

</mosaic_0001>

<llo_original>
// kernel: tpu_custom_call.1
$region0: #{tpu_custom_call.1}
  #allocation0 [shape = 'u32[]', space=smem, size = 0x4, offset = 0x4, fixed_abs, tag = 'smem constant byte address 0x4 - core index']
  #allocation1 [shape = 'u32[144,128]{1,0:T(1,128)}', space=vmem, size = 0x12000, scoped, tag = 'internal scratch']
  %s0 = inlined_call_operand.vmem [shape: f32[8,16], index: 0, kind: input, shape index: {}]
  %s1 = inlined_call_operand.vmem [shape: f32[16,128], index: 1, kind: input, shape index: {}]
  %s2 = inlined_call_operand.vmem [shape: f32[1,128], index: 2, kind: input, shape index: {}]
  %s3 = inlined_call_operand.vmem [shape: f32[128,4], index: 3, kind: input, shape index: {}]
  %s4 = inlined_call_operand.vmem [shape: f32[1,4], index: 4, kind: input, shape index: {}]
  %s5 = inlined_call_operand.vmem [shape: f32[8,4], index: 5, kind: output, shape index: {}]
  %s6 = sld [smem:[#allocation0]]
  $region30: #{tpu_custom_call.1} parent=0
    _
  %s8 = ssub.s32 1, %s6
  %s9 = scalar_select 0, %s8, %s6
  // Predicated region
  $region2: #{tpu_custom_call.1} parent=0 // pred_check
    _
  $region3: #{tpu_custom_call.1} parent=0 // pred_check_branch
    %11 = sbr.rel (0) target = $region5
  $region4: #{tpu_custom_call.1} parent=0 // pred_region
    _
  $region5: #{tpu_custom_call.1} parent=0 // pred_fallthru
    _
  // Predicated region
  $region6: #{tpu_custom_call.1} parent=0 // pred_check
    _
  $region7: #{tpu_custom_call.1} parent=0 // pred_check_branch
    %13 = sbr.rel (0) target = $region9
  $region8: #{tpu_custom_call.1} parent=0 // pred_region
    _
  $region9: #{tpu_custom_call.1} parent=0 // pred_fallthru
    _
  // Predicated region
  $region10: #{tpu_custom_call.1} parent=0 // pred_check
    _
  $region11: #{tpu_custom_call.1} parent=0 // pred_check_branch
    %15 = sbr.rel (0) target = $region13
  $region12: #{tpu_custom_call.1} parent=0 // pred_region
    _
  $region13: #{tpu_custom_call.1} parent=0 // pred_fallthru
    _
  // Predicated region
  $region14: #{tpu_custom_call.1} parent=0 // pred_check
    _
  $region15: #{tpu_custom_call.1} parent=0 // pred_check_branch
    %17 = sbr.rel (0) target = $region17
  $region16: #{tpu_custom_call.1} parent=0 // pred_region
    _
  $region17: #{tpu_custom_call.1} parent=0 // pred_fallthru
    _
  // Predicated region
  $region18: #{tpu_custom_call.1} parent=0 // pred_check
    _
  $region19: #{tpu_custom_call.1} parent=0 // pred_check_branch
    %19 = sbr.rel (0) target = $region21
  $region20: #{tpu_custom_call.1} parent=0 // pred_region
    _
  $region21: #{tpu_custom_call.1} parent=0 // pred_fallthru
    _
  %v20 = vld [vmem:[%s0] sm:$0xff]
  %v21 = vld [vmem:[%s1] sm:$0xff]
  %v22 = vld [vmem:[%s1 + $0x8] sm:$0xff]
  %v23 = vld [vmem:[%s2] sm:$0x1]
  %v25 = vlaneseq
  %v26 = vshrl.u32 %v25, 7
  %v27 = vsub.s32 0, %v26
  %v28 = vrot.slane %v23, %v27
  %vm30 = vcmask 130048
  %v32 = vsel %vm30, %v20, 0
  %34 = vmatprep.subr.mxu0 0.0
  %35 = vmatpush1.msra.mxu0 %v21
  %36 = vmatprep.subr.mxu0 0.0
  %37 = vmatpush1.msra.mxu0 %v22
  %38 = vmatprep.subr.mxu0 0.0
  %39 = vmatpush1.msra.mxu0 0.0
  %40 = vmatprep.subr.mxu0 0.0
  %41 = vmatpush1.msra.mxu0 0.0
  %42 = vmatprep.subr.mxu0 0.0
  %43 = vmatpush1.msra.mxu0 0.0
  %44 = vmatprep.subr.mxu0 0.0
  %45 = vmatpush1.msra.mxu0 0.0
  %46 = vmatprep.subr.mxu0 0.0
  %47 = vmatpush1.msra.mxu0 0.0
  %48 = vmatprep.subr.mxu0 0.0
  %49 = vmatpush1.msra.mxu0 0.0
  %50 = vmatprep.subr.mxu0 0.0
  %51 = vmatpush1.msra.mxu0 0.0
  %52 = vmatprep.subr.mxu0 0.0
  %53 = vmatpush1.msra.mxu0 0.0
  %54 = vmatprep.subr.mxu0 0.0
  %55 = vmatpush1.msra.mxu0 0.0
  %56 = vmatprep.subr.mxu0 0.0
  %57 = vmatpush1.msra.mxu0 0.0
  %58 = vmatprep.subr.mxu0 0.0
  %59 = vmatpush1.msra.mxu0 0.0
  %60 = vmatprep.subr.mxu0 0.0
  %61 = vmatpush1.msra.mxu0 0.0
  %62 = vmatprep.subr.mxu0 0.0
  %63 = vmatpush1.msra.mxu0 0.0
  %64 = vmatprep.subr.mxu0 0.0
  %65 = vmatpush1.msra.mxu0 0.0
  %66 = vmatprep.subr.mxu0 0.0
  %67 = vmatpush1.msra.mxu0 0.0
  %68 = vmatprep.subr.mxu0 0.0
  %69 = vmatpush1.msra.mxu0 0.0
  %70 = vmatprep.subr.mxu0 0.0
  %71 = vmatpush1.msra.mxu0 0.0
  %72 = vmatprep.subr.mxu0 0.0
  %73 = vmatpush1.msra.mxu0 0.0
  %74 = vmatprep.subr.mxu0 0.0
  %75 = vmatpush1.msra.mxu0 0.0
  %76 = vmatprep.subr.mxu0 0.0
  %77 = vmatpush1.msra.mxu0 0.0
  %78 = vmatprep.subr.mxu0 0.0
  %79 = vmatpush1.msra.mxu0 0.0
  %80 = vmatprep.subr.mxu0 0.0
  %81 = vmatpush1.msra.mxu0 0.0
  %82 = vmatprep.subr.mxu0 0.0
  %83 = vmatpush1.msra.mxu0 0.0
  %84 = vmatprep.subr.mxu0 0.0
  %85 = vmatpush1.msra.mxu0 0.0
  %86 = vmatprep.subr.mxu0 0.0
  %87 = vmatpush1.msra.mxu0 0.0
  %88 = vmatprep.subr.mxu0 0.0
  %89 = vmatpush1.msra.mxu0 0.0
  %90 = vmatprep.subr.mxu0 0.0
  %91 = vmatpush1.msra.mxu0 0.0
  %92 = vmatprep.subr.mxu0 0.0
  %93 = vmatpush1.msra.mxu0 0.0
  %94 = vmatprep.subr.mxu0 0.0
  %95 = vmatpush1.msra.mxu0 0.0
  %96 = vmatprep.subr.mxu0 0.0
  %97 = vmatpush1.msra.mxu0 0.0
  %98 = vmatprep.mubr.f32.mxu0 0.0
  %99 = vmatmul.mubr.f32.gmra.mrb[0].mxu0 %v32
  %v100 = vpop.f32.mrb[0].mxu0
  %v101 = vadd.f32 %v28, %v100
  %v102 = vpop.f32.mrb[0].mxu0
  %103 = vdwg.mxu0
  %v104 = vmax.f32 %v101, 0.0
  %v105 = vld [vmem:[%s3] sm:$0xff]
  %v106 = vld [vmem:[%s3 + $0x8] sm:$0xff]
  %v107 = vld [vmem:[%s3 + $0x10] sm:$0xff]
  %v108 = vld [vmem:[%s3 + $0x18] sm:$0xff]
  %v109 = vld [vmem:[%s3 + $0x20] sm:$0xff]
  %v110 = vld [vmem:[%s3 + $0x28] sm:$0xff]
  %v111 = vld [vmem:[%s3 + $0x30] sm:$0xff]
  %v112 = vld [vmem:[%s3 + $0x38] sm:$0xff]
  %v113 = vld [vmem:[%s3 + $0x40] sm:$0xff]
  %v114 = vld [vmem:[%s3 + $0x48] sm:$0xff]
  %v115 = vld [vmem:[%s3 + $0x50] sm:$0xff]
  %v116 = vld [vmem:[%s3 + $0x58] sm:$0xff]
  %v117 = vld [vmem:[%s3 + $0x60] sm:$0xff]
  %v118 = vld [vmem:[%s3 + $0x68] sm:$0xff]
  %v119 = vld [vmem:[%s3 + $0x70] sm:$0xff]
  %v120 = vld [vmem:[%s3 + $0x78] sm:$0xff]
  %v121 = vld [vmem:[%s4] sm:$0x1]
  %v123 = vlaneseq
  %v124 = vshrl.u32 %v123, 7
  %v125 = vsub.s32 0, %v124
  %v126 = vrot.slane %v121, %v125
  %128 = vmatprep.subr.mxu0 0.0
  %129 = vmatpush1.msra.mxu0 %v105
  %130 = vmatprep.subr.mxu0 0.0
  %131 = vmatpush1.msra.mxu0 %v106
  %132 = vmatprep.subr.mxu0 0.0
  %133 = vmatpush1.msra.mxu0 %v107
  %134 = vmatprep.subr.mxu0 0.0
  %135 = vmatpush1.msra.mxu0 %v108
  %136 = vmatprep.subr.mxu0 0.0
  %137 = vmatpush1.msra.mxu0 %v109
  %138 = vmatprep.subr.mxu0 0.0
  %139 = vmatpush1.msra.mxu0 %v110
  %140 = vmatprep.subr.mxu0 0.0
  %141 = vmatpush1.msra.mxu0 %v111
  %142 = vmatprep.subr.mxu0 0.0
  %143 = vmatpush1.msra.mxu0 %v112
  %144 = vmatprep.subr.mxu0 0.0
  %145 = vmatpush1.msra.mxu0 %v113
  %146 = vmatprep.subr.mxu0 0.0
  %147 = vmatpush1.msra.mxu0 %v114
  %148 = vmatprep.subr.mxu0 0.0
  %149 = vmatpush1.msra.mxu0 %v115
  %150 = vmatprep.subr.mxu0 0.0
  %151 = vmatpush1.msra.mxu0 %v116
  %152 = vmatprep.subr.mxu0 0.0
  %153 = vmatpush1.msra.mxu0 %v117
  %154 = vmatprep.subr.mxu0 0.0
  %155 = vmatpush1.msra.mxu0 %v118
  %156 = vmatprep.subr.mxu0 0.0
  %157 = vmatpush1.msra.mxu0 %v119
  %158 = vmatprep.subr.mxu0 0.0
  %159 = vmatpush1.msra.mxu0 %v120
  %160 = vmatprep.subr.mxu0 0.0
  %161 = vmatpush1.msra.mxu0 0.0
  %162 = vmatprep.subr.mxu0 0.0
  %163 = vmatpush1.msra.mxu0 0.0
  %164 = vmatprep.subr.mxu0 0.0
  %165 = vmatpush1.msra.mxu0 0.0
  %166 = vmatprep.subr.mxu0 0.0
  %167 = vmatpush1.msra.mxu0 0.0
  %168 = vmatprep.subr.mxu0 0.0
  %169 = vmatpush1.msra.mxu0 0.0
  %170 = vmatprep.subr.mxu0 0.0
  %171 = vmatpush1.msra.mxu0 0.0
  %172 = vmatprep.subr.mxu0 0.0
  %173 = vmatpush1.msra.mxu0 0.0
  %174 = vmatprep.subr.mxu0 0.0
  %175 = vmatpush1.msra.mxu0 0.0
  %176 = vmatprep.subr.mxu0 0.0
  %177 = vmatpush1.msra.mxu0 0.0
  %178 = vmatprep.subr.mxu0 0.0
  %179 = vmatpush1.msra.mxu0 0.0
  %180 = vmatprep.subr.mxu0 0.0
  %181 = vmatpush1.msra.mxu0 0.0
  %182 = vmatprep.subr.mxu0 0.0
  %183 = vmatpush1.msra.mxu0 0.0
  %184 = vmatprep.subr.mxu0 0.0
  %185 = vmatpush1.msra.mxu0 0.0
  %186 = vmatprep.subr.mxu0 0.0
  %187 = vmatpush1.msra.mxu0 0.0
  %188 = vmatprep.subr.mxu0 0.0
  %189 = vmatpush1.msra.mxu0 0.0
  %190 = vmatprep.subr.mxu0 0.0
  %191 = vmatpush1.msra.mxu0 0.0
  %192 = vmatprep.mubr.f32.mxu0 0.0
  %193 = vmatmul.mubr.f32.gmra.mrb[0].mxu0 %v104
  %v194 = vpop.f32.mrb[0].mxu0
  %v195 = vadd.f32 %v126, %v194
  %v196 = vpop.f32.mrb[0].mxu0
  %197 = vdwg.mxu0
  %vm198 = vcmask 31744
  %199 = vst.msk [vmem:[%s5] sm:$0xff] %vm198, %v195
  // Predicated region
  $region22: #{tpu_custom_call.1} parent=0 // pred_check
    _
  $region23: #{tpu_custom_call.1} parent=0 // pred_check_branch
    %201 = sbr.rel (0) target = $region25
  $region24: #{tpu_custom_call.1} parent=0 // pred_region
    _
  $region25: #{tpu_custom_call.1} parent=0 // pred_fallthru
    _
  // Predicated region
  $region26: #{tpu_custom_call.1} parent=0 // pred_check
    _
  $region27: #{tpu_custom_call.1} parent=0 // pred_check_branch
    %203 = sbr.rel (0) target = $region29
  $region28: #{tpu_custom_call.1} parent=0 // pred_region
    _
  $region29: #{tpu_custom_call.1} parent=0 // pred_fallthru
    _

// kernel: tpu_custom_call.1
$region0: #{tpu_custom_call.1}
  #allocation0 [shape = 'u32[]', space=smem, size = 0x4, offset = 0x4, fixed_abs, tag = 'smem constant byte address 0x4 - core index']
  #allocation1 [shape = 'u32[144,128]{1,0:T(1,128)}', space=vmem, size = 0x12000, scoped, tag = 'internal scratch']
  %s0 = inlined_call_operand.vmem [shape: f32[8,16], index: 0, kind: input, shape index: {}]
  %s1 = inlined_call_operand.vmem [shape: f32[16,128], index: 1, kind: input, shape index: {}]
  %s2 = inlined_call_operand.vmem [shape: f32[1,128], index: 2, kind: input, shape index: {}]
  %s3 = inlined_call_operand.vmem [shape: f32[128,4], index: 3, kind: input, shape index: {}]
  %s4 = inlined_call_operand.vmem [shape: f32[1,4], index: 4, kind: input, shape index: {}]
  %s5 = inlined_call_operand.vmem [shape: f32[8,4], index: 5, kind: output, shape index: {}]
  %s6 = sld [smem:[#allocation0]]
  $region30: #{tpu_custom_call.1} parent=0
    _
  %s8 = ssub.s32 1, %s6
  %s9 = scalar_select 0, %s8, %s6
  // Predicated region
  $region2: #{tpu_custom_call.1} parent=0 // pred_check
    _
  $region3: #{tpu_custom_call.1} parent=0 // pred_check_branch
    %11 = sbr.rel (0) target = $region5
  $region4: #{tpu_custom_call.1} parent=0 // pred_region
    _
  $region5: #{tpu_custom_call.1} parent=0 // pred_fallthru
    _
  // Predicated region
  $region6: #{tpu_custom_call.1} parent=0 // pred_check
    _
  $region7: #{tpu_custom_call.1} parent=0 // pred_check_branch
    %13 = sbr.rel (0) target = $region9
  $region8: #{tpu_custom_call.1} parent=0 // pred_region
    _
  $region9: #{tpu_custom_call.1} parent=0 // pred_fallthru
    _
  // Predicated region
  $region10: #{tpu_custom_call.1} parent=0 // pred_check
    _
  $region11: #{tpu_custom_call.1} parent=0 // pred_check_branch
    %15 = sbr.rel (0) target = $region13
  $region12: #{tpu_custom_call.1} parent=0 // pred_region
    _
  $region13: #{tpu_custom_call.1} parent=0 // pred_fallthru
    _
  // Predicated region
  $region14: #{tpu_custom_call.1} parent=0 // pred_check
    _
  $region15: #{tpu_custom_call.1} parent=0 // pred_check_branch
    %17 = sbr.rel (0) target = $region17
  $region16: #{tpu_custom_call.1} parent=0 // pred_region
    _
  $region17: #{tpu_custom_call.1} parent=0 // pred_fallthru
    _
  // Predicated region
  $region18: #{tpu_custom_call.1} parent=0 // pred_check
    _
  $region19: #{tpu_custom_call.1} parent=0 // pred_check_branch
    %19 = sbr.rel (0) target = $region21
  $region20: #{tpu_custom_call.1} parent=0 // pred_region
    _
  $region21: #{tpu_custom_call.1} parent=0 // pred_fallthru
    _
  %v20 = vld [vmem:[%s0] sm:$0xff]
  %v21 = vld [vmem:[%s1] sm:$0xff]
  %v22 = vld [vmem:[%s1 + $0x8] sm:$0xff]
  %v23 = vld [vmem:[%s2] sm:$0x1]
  %v25 = vlaneseq
  %v26 = vshrl.u32 %v25, 7
  %v27 = vsub.s32 0, %v26
  %v28 = vrot.slane %v23, %v27
  %vm30 = vcmask 130048
  %v32 = vsel %vm30, %v20, 0
  %34 = vmatprep.subr.mxu0 0.0
  %35 = vmatpush1.msra.mxu0 %v21
  %36 = vmatprep.subr.mxu0 0.0
  %37 = vmatpush1.msra.mxu0 %v22
  %38 = vmatprep.subr.mxu0 0.0
  %39 = vmatpush1.msra.mxu0 0.0
  %40 = vmatprep.subr.mxu0 0.0
  %41 = vmatpush1.msra.mxu0 0.0
  %42 = vmatprep.subr.mxu0 0.0
  %43 = vmatpush1.msra.mxu0 0.0
  %44 = vmatprep.subr.mxu0 0.0
  %45 = vmatpush1.msra.mxu0 0.0
  %46 = vmatprep.subr.mxu0 0.0
  %47 = vmatpush1.msra.mxu0 0.0
  %48 = vmatprep.subr.mxu0 0.0
  %49 = vmatpush1.msra.mxu0 0.0
  %50 = vmatprep.subr.mxu0 0.0
  %51 = vmatpush1.msra.mxu0 0.0
  %52 = vmatprep.subr.mxu0 0.0
  %53 = vmatpush1.msra.mxu0 0.0
  %54 = vmatprep.subr.mxu0 0.0
  %55 = vmatpush1.msra.mxu0 0.0
  %56 = vmatprep.subr.mxu0 0.0
  %57 = vmatpush1.msra.mxu0 0.0
  %58 = vmatprep.subr.mxu0 0.0
  %59 = vmatpush1.msra.mxu0 0.0
  %60 = vmatprep.subr.mxu0 0.0
  %61 = vmatpush1.msra.mxu0 0.0
  %62 = vmatprep.subr.mxu0 0.0
  %63 = vmatpush1.msra.mxu0 0.0
  %64 = vmatprep.subr.mxu0 0.0
  %65 = vmatpush1.msra.mxu0 0.0
  %66 = vmatprep.subr.mxu0 0.0
  %67 = vmatpush1.msra.mxu0 0.0
  %68 = vmatprep.subr.mxu0 0.0
  %69 = vmatpush1.msra.mxu0 0.0
  %70 = vmatprep.subr.mxu0 0.0
  %71 = vmatpush1.msra.mxu0 0.0
  %72 = vmatprep.subr.mxu0 0.0
  %73 = vmatpush1.msra.mxu0 0.0
  %74 = vmatprep.subr.mxu0 0.0
  %75 = vmatpush1.msra.mxu0 0.0
  %76 = vmatprep.subr.mxu0 0.0
  %77 = vmatpush1.msra.mxu0 0.0
  %78 = vmatprep.subr.mxu0 0.0
  %79 = vmatpush1.msra.mxu0 0.0
  %80 = vmatprep.subr.mxu0 0.0
  %81 = vmatpush1.msra.mxu0 0.0
  %82 = vmatprep.subr.mxu0 0.0
  %83 = vmatpush1.msra.mxu0 0.0
  %84 = vmatprep.subr.mxu0 0.0
  %85 = vmatpush1.msra.mxu0 0.0
  %86 = vmatprep.subr.mxu0 0.0
  %87 = vmatpush1.msra.mxu0 0.0
  %88 = vmatprep.subr.mxu0 0.0
  %89 = vmatpush1.msra.mxu0 0.0
  %90 = vmatprep.subr.mxu0 0.0
  %91 = vmatpush1.msra.mxu0 0.0
  %92 = vmatprep.subr.mxu0 0.0
  %93 = vmatpush1.msra.mxu0 0.0
  %94 = vmatprep.subr.mxu0 0.0
  %95 = vmatpush1.msra.mxu0 0.0
  %96 = vmatprep.subr.mxu0 0.0
  %97 = vmatpush1.msra.mxu0 0.0
  %98 = vmatprep.mubr.f32.mxu0 0.0
  %99 = vmatmul.mubr.f32.gmra.mrb[0].mxu0 %v32
  %v100 = vpop.f32.mrb[0].mxu0
  %v101 = vadd.f32 %v28, %v100
  %v102 = vpop.f32.mrb[0].mxu0
  %103 = vdwg.mxu0
  %v104 = vmax.f32 %v101, 0.0
  %v105 = vld [vmem:[%s3] sm:$0xff]
  %v106 = vld [vmem:[%s3 + $0x8] sm:$0xff]
  %v107 = vld [vmem:[%s3 + $0x10] sm:$0xff]
  %v108 = vld [vmem:[%s3 + $0x18] sm:$0xff]
  %v109 = vld [vmem:[%s3 + $0x20] sm:$0xff]
  %v110 = vld [vmem:[%s3 + $0x28] sm:$0xff]
  %v111 = vld [vmem:[%s3 + $0x30] sm:$0xff]
  %v112 = vld [vmem:[%s3 + $0x38] sm:$0xff]
  %v113 = vld [vmem:[%s3 + $0x40] sm:$0xff]
  %v114 = vld [vmem:[%s3 + $0x48] sm:$0xff]
  %v115 = vld [vmem:[%s3 + $0x50] sm:$0xff]
  %v116 = vld [vmem:[%s3 + $0x58] sm:$0xff]
  %v117 = vld [vmem:[%s3 + $0x60] sm:$0xff]
  %v118 = vld [vmem:[%s3 + $0x68] sm:$0xff]
  %v119 = vld [vmem:[%s3 + $0x70] sm:$0xff]
  %v120 = vld [vmem:[%s3 + $0x78] sm:$0xff]
  %v121 = vld [vmem:[%s4] sm:$0x1]
  %v123 = vlaneseq
  %v124 = vshrl.u32 %v123, 7
  %v125 = vsub.s32 0, %v124
  %v126 = vrot.slane %v121, %v125
  %128 = vmatprep.subr.mxu0 0.0
  %129 = vmatpush1.msra.mxu0 %v105
  %130 = vmatprep.subr.mxu0 0.0
  %131 = vmatpush1.msra.mxu0 %v106
  %132 = vmatprep.subr.mxu0 0.0
  %133 = vmatpush1.msra.mxu0 %v107
  %134 = vmatprep.subr.mxu0 0.0
  %135 = vmatpush1.msra.mxu0 %v108
  %136 = vmatprep.subr.mxu0 0.0
  %137 = vmatpush1.msra.mxu0 %v109
  %138 = vmatprep.subr.mxu0 0.0
  %139 = vmatpush1.msra.mxu0 %v110
  %140 = vmatprep.subr.mxu0 0.0
  %141 = vmatpush1.msra.mxu0 %v111
  %142 = vmatprep.subr.mxu0 0.0
  %143 = vmatpush1.msra.mxu0 %v112
  %144 = vmatprep.subr.mxu0 0.0
  %145 = vmatpush1.msra.mxu0 %v113
  %146 = vmatprep.subr.mxu0 0.0
  %147 = vmatpush1.msra.mxu0 %v114
  %148 = vmatprep.subr.mxu0 0.0
  %149 = vmatpush1.msra.mxu0 %v115
  %150 = vmatprep.subr.mxu0 0.0
  %151 = vmatpush1.msra.mxu0 %v116
  %152 = vmatprep.subr.mxu0 0.0
  %153 = vmatpush1.msra.mxu0 %v117
  %154 = vmatprep.subr.mxu0 0.0
  %155 = vmatpush1.msra.mxu0 %v118
  %156 = vmatprep.subr.mxu0 0.0
  %157 = vmatpush1.msra.mxu0 %v119
  %158 = vmatprep.subr.mxu0 0.0
  %159 = vmatpush1.msra.mxu0 %v120
  %160 = vmatprep.subr.mxu0 0.0
  %161 = vmatpush1.msra.mxu0 0.0
  %162 = vmatprep.subr.mxu0 0.0
  %163 = vmatpush1.msra.mxu0 0.0
  %164 = vmatprep.subr.mxu0 0.0
  %165 = vmatpush1.msra.mxu0 0.0
  %166 = vmatprep.subr.mxu0 0.0
  %167 = vmatpush1.msra.mxu0 0.0
  %168 = vmatprep.subr.mxu0 0.0
  %169 = vmatpush1.msra.mxu0 0.0
  %170 = vmatprep.subr.mxu0 0.0
  %171 = vmatpush1.msra.mxu0 0.0
  %172 = vmatprep.subr.mxu0 0.0
  %173 = vmatpush1.msra.mxu0 0.0
  %174 = vmatprep.subr.mxu0 0.0
  %175 = vmatpush1.msra.mxu0 0.0
  %176 = vmatprep.subr.mxu0 0.0
  %177 = vmatpush1.msra.mxu0 0.0
  %178 = vmatprep.subr.mxu0 0.0
  %179 = vmatpush1.msra.mxu0 0.0
  %180 = vmatprep.subr.mxu0 0.0
  %181 = vmatpush1.msra.mxu0 0.0
  %182 = vmatprep.subr.mxu0 0.0
  %183 = vmatpush1.msra.mxu0 0.0
  %184 = vmatprep.subr.mxu0 0.0
  %185 = vmatpush1.msra.mxu0 0.0
  %186 = vmatprep.subr.mxu0 0.0
  %187 = vmatpush1.msra.mxu0 0.0
  %188 = vmatprep.subr.mxu0 0.0
  %189 = vmatpush1.msra.mxu0 0.0
  %190 = vmatprep.subr.mxu0 0.0
  %191 = vmatpush1.msra.mxu0 0.0
  %192 = vmatprep.mubr.f32.mxu0 0.0
  %193 = vmatmul.mubr.f32.gmra.mrb[0].mxu0 %v104
  %v194 = vpop.f32.mrb[0].mxu0
  %v195 = vadd.f32 %v126, %v194
  %v196 = vpop.f32.mrb[0].mxu0
  %197 = vdwg.mxu0
  %vm198 = vcmask 31744
  %199 = vst.msk [vmem:[%s5] sm:$0xff] %vm198, %v195
  // Predicated region
  $region22: #{tpu_custom_call.1} parent=0 // pred_check
    _
  $region23: #{tpu_custom_call.1} parent=0 // pred_check_branch
    %201 = sbr.rel (0) target = $region25
  $region24: #{tpu_custom_call.1} parent=0 // pred_region
    _
  $region25: #{tpu_custom_call.1} parent=0 // pred_fallthru
    _
  // Predicated region
  $region26: #{tpu_custom_call.1} parent=0 // pred_check
    _
  $region27: #{tpu_custom_call.1} parent=0 // pred_check_branch
    %203 = sbr.rel (0) target = $region29
  $region28: #{tpu_custom_call.1} parent=0 // pred_region
    _
  $region29: #{tpu_custom_call.1} parent=0 // pred_fallthru
    _

</llo_original>
